<compile_context>
chip_gen: v7x
topology: tpu7x:2x2x1
jax: 0.10.0
libtpu: 0.0.40
codegen_flags: <defaults>
</compile_context>

<pallas_src>
import functools
import math

import jax
import jax.numpy as jnp
from jax import lax
from jax.experimental import pallas as pl
from jax.experimental.pallas import tpu as pltpu

_BIG = 1.0e30          # "infinity" fill for out-of-grid potential (f32-safe)
_N_SOLVER_ITERS = 5    # LaplacianSolver.forward calls the CUDA solver 5 times
_LANE = 128
_SUBLANE = 8


def _round_up(n, m):
    return ((n + m - 1) // m) * m


def _laplace_kernel(v_ref, c_ref, bt_ref, bc_ref, q_ref,
                    out_grid_ref, out_samp_ref, *,
                    cost_scale, width, real_h, real_w):
    f32 = jnp.float32
    Hp, Wp = v_ref.shape          # padded grid (halo lives in the pad region)
    Nq = q_ref.shape[1]           # query count, already padded to 128 multiple

    bt = bt_ref[...]
    bc = bc_ref[...]

    # First-call behaviour of LaplaceNet: V[boundary_types > 0] = boundary_conditions
    V = jnp.where(bt > 0.0, bc, v_ref[...])

    # C_pos = relu(C) + cost_scale
    C_tot = jnp.maximum(c_ref[...], 0.0) + f32(cost_scale)

    free = bt == 0.0              # halo cells carry bt = -1 -> never free

    if width > 0:
        # objects_bounds = bc * (bt == 1) * (bc > 0)
        obj = jnp.where((bt == 1.0) & (bc > 0.0), bc, 0.0)
        # width x width mean filter, stride 1, zero padding='same'
        # (separable: row pass then column pass; the halo holds zeros, so the
        #  roll wrap-around supplies the conv zero padding for free).
        left = (width - 1) // 2
        row_acc = obj                                   # dx == 0 term
        for b in range(width):
            dx = b - left
            if dx:
                row_acc = row_acc + jnp.roll(obj, -dx, axis=1)
        acc = row_acc                                   # dy == 0 term
        for a in range(width):
            dy = a - left
            if dy:
                acc = acc + jnp.roll(row_acc, -dy, axis=0)
        C_tot = C_tot + jnp.where(free, acc * f32(1.0 / (width * width)), 0.0)

    # TODO(synk): the original uses the closed-source `laplacian_solver` CUDA
    # extension; its exact per-sweep update is unavailable.  Each sweep is
    # approximated with a min-plus (value-iteration) update over the same
    # 8-neighbour stencil encoded by `indexes`, holding boundary cells fixed
    # at their boundary conditions.
    #
    # Pre-masked per-move costs: non-free cells (boundaries + halo) get a
    # ~1e30 move cost, so the sweep's plain `min(v, best)` leaves them fixed
    # (real grid values are orders of magnitude below _BIG, so best >= ~1e30
    # for every non-free cell).
    C_axis = jnp.where(free, C_tot, _BIG)
    C_diag = jnp.where(free, C_tot * f32(math.sqrt(2.0)), _BIG)

    def sweep(_, v):
        # 6 rotates per sweep (2 sublane + 4 lane) instead of 8: the min over
        # the 4 diagonal neighbours equals the lane-rolls of the already
        # reduced min(up, dn) plane.  Fold shifted planes into running mins
        # immediately to keep vreg/VMEM pressure low.
        m_ud = jnp.minimum(jnp.roll(v, 1, axis=0), jnp.roll(v, -1, axis=0))
        m_ax = jnp.minimum(jnp.roll(v, 1, axis=1), jnp.roll(v, -1, axis=1))
        m_ax = jnp.minimum(m_ax, m_ud)
        m_dg = jnp.minimum(jnp.roll(m_ud, 1, axis=1),
                           jnp.roll(m_ud, -1, axis=1))
        best = jnp.minimum(m_ax + C_axis, m_dg + C_diag)
        return jnp.minimum(v, best)

    V = lax.fori_loop(0, _N_SOLVER_ITERS, sweep, V, unroll=True)

    out_grid_ref[...] = V

    # --- bilinear grid_sample (align_corners=True, padding_mode='border') ---
    # Fully lane-dense: every per-query vector is a (1, Nq) row.  The gather
    # is one MXU matmul (column interpolation) + one sublane-axis reduction
    # (row interpolation) -> output already laid out as (1, Nq).
    qx = q_ref[0:1, :]                    # (1, Nq): x -> width axis
    qy = q_ref[1:2, :]                    # (1, Nq): y -> height axis
    w_max = f32(real_w - 1)
    h_max = f32(real_h - 1)
    fx = jnp.clip((qx + 1.0) * 0.5 * w_max, 0.0, w_max)
    fy = jnp.clip((qy + 1.0) * 0.5 * h_max, 0.0, h_max)
    x0f = jnp.floor(fx)
    y0f = jnp.floor(fy)
    wx1 = fx - x0f
    wx0 = 1.0 - wx1
    wy1 = fy - y0f
    wy0 = 1.0 - wy1
    x0 = x0f.astype(jnp.int32)
    y0 = y0f.astype(jnp.int32)
    x1 = jnp.minimum(x0 + 1, real_w - 1)
    y1 = jnp.minimum(y0 + 1, real_h - 1)

    # Sampling source kept finite so 0-weight columns/rows (padded halo or
    # degenerate inputs) can never produce 0 * inf = NaN in the matmul.
    Vs = jnp.clip(V, -_BIG, _BIG)

    # Column-interpolation weights as a (Wp, Nq) one-hot-weighted matrix.
    # Padded grid columns (j >= real_w) always get weight 0, so the halo
    # never contaminates the result.
    col_iota = lax.broadcasted_iota(jnp.int32, (Wp, Nq), 0)
    cw = (jnp.where(col_iota == x0, wx0, 0.0)
          + jnp.where(col_iota == x1, wx1, 0.0))
    colsT = jnp.dot(Vs, cw, preferred_element_type=f32)       # (Hp, Nq)

    # Row-interpolation weights as a (Hp, Nq) one-hot-weighted matrix.
    row_iota = lax.broadcasted_iota(jnp.int32, (Hp, Nq), 0)
    rw = (jnp.where(row_iota == y0, wy0, 0.0)
          + jnp.where(row_iota == y1, wy1, 0.0))

    out_samp_ref[...] = jnp.sum(rw * colsT, axis=0, keepdims=True)  # (1, Nq)


def laplace_net_forward(x, boundary_types, boundary_conditions, C_param, V,
                        *, cost_scale, width):
    """Returns ((out, C, J=None), new_V) mirroring LaplaceNet.forward (2-D grids)."""
    # TODO(synk): calc_gradient=True path (finite differences + extra sampling)
    # and the custom autograd backward are not implemented.
    H, W = V.shape
    halo = max(1, width // 2)                 # halo needed by the box filter / stencil
    Hp = _round_up(H + halo, _SUBLANE)
    Wp = _round_up(W + halo, _LANE)           # lane-dense grid layout

    def pad_to(a, fill):
        return jnp.pad(a.astype(jnp.float32), ((0, Hp - H), (0, Wp - W)),
                       constant_values=float(fill))

    V_p = pad_to(V, _BIG)                     # halo potential = +inf -> never chosen
    C_p = pad_to(C_param, 0.0)
    bt_p = pad_to(boundary_types, -1.0)       # halo is neither free nor object
    bc_p = pad_to(boundary_conditions, 0.0)

    q = x.reshape(-1, 2).astype(jnp.float32)  # (Nq, 2), last dim = (x, y)
    Nq = q.shape[0]
    Nq_pad = _round_up(max(Nq, _LANE), _LANE)
    qT = jnp.zeros((2, Nq_pad), jnp.float32).at[:, :Nq].set(q.T)

    kernel = functools.partial(_laplace_kernel,
                               cost_scale=float(cost_scale),
                               width=int(width),
                               real_h=int(H), real_w=int(W))

    plane = Hp * Wp * 4
    cost = pl.CostEstimate(
        flops=int(_N_SOLVER_ITERS * 16 * Hp * Wp        # sweeps (6 rolls + mins/adds)
                  + 2 * Hp * Wp * Nq_pad                # gather matmul
                  + (2 * width + 10) * Hp * Wp),        # box filter + setup
        transcendentals=0,
        bytes_accessed=int(6 * plane + 3 * Nq_pad * 4))

    # Per-generation VMEM budget: physical capacity minus ~16 MiB headroom
    # (v7x: 64 MiB phys -> ~48 MiB cap; v5e/v6e: 128 MiB phys -> ~112 MiB cap).
    try:
        phys_vmem = int(pltpu.get_tpu_info().vmem_capacity_bytes)
    except Exception:  # conservative fallback if the query is unavailable
        phys_vmem = 64 * 2**20
    vmem_cap = max(32 * 2**20, phys_vmem - 16 * 2**20)
    vmem_limit = int(min(vmem_cap,
                         max(32 * 2**20, 24 * plane + 16 * Nq_pad * 4)))

    vmem = pl.BlockSpec(memory_space=pltpu.MemorySpace.VMEM)
    out_grid_p, out_samp = pl.pallas_call(
        kernel,
        out_shape=(jax.ShapeDtypeStruct((Hp, Wp), jnp.float32),
                   jax.ShapeDtypeStruct((1, Nq_pad), jnp.float32)),
        in_specs=[vmem, vmem, vmem, vmem, vmem],
        out_specs=(vmem, vmem),
        input_output_aliases={0: 0},          # V_p buffer donated to the grid output
        compiler_params=pltpu.CompilerParams(vmem_limit_bytes=vmem_limit),
        cost_estimate=cost,
    )(V_p, C_p, bt_p, bc_p, qT)

    new_V = out_grid_p[:H, :W]
    out = out_samp[0, :Nq].reshape(x.shape[1], x.shape[2])  # matches .squeeze().squeeze()
    return (out, C_param, None), new_V


if __name__ == "__main__":
    key = jax.random.PRNGKey(0)
    kq, kc = jax.random.split(key)

    H, W = 16, 16
    res = (H, W)
    max_val = 100.0
    cost_scale = 1.0
    obj_width = 3

    # Parameter init matching LaplaceNet.__init__ (cost_scale * ones), plus a
    # tiny deterministic perturbation so relu(C) is exercised.
    C_param = cost_scale * jnp.ones(res, jnp.float32) \
        + 0.01 * jax.random.normal(kc, res, jnp.float32)

    # Boundary setup: a 3x3 obstacle block (type 1, high potential) and a goal cell.
    bt = jnp.zeros(res, jnp.float32)
    bc = jnp.zeros(res, jnp.float32)
    bt = bt.at[4:7, 4:7].set(1.0)
    bc = bc.at[4:7, 4:7].set(max_val)
    bt = bt.at[12, 12].set(2.0)
    bc = bc.at[12, 12].set(0.0)

    # self.V initial state
    V0 = max_val * jnp.ones(res, jnp.float32)

    # Query points for grid_sample: (N=1, H_out=8, W_out=8, 2) in [-1, 1].
    x = jax.random.uniform(kq, (1, 8, 8, 2), jnp.float32, minval=-1.0, maxval=1.0)

    (out, C_out, J), new_V = laplace_net_forward(
        x, bt, bc, C_param, V0, cost_scale=cost_scale, width=obj_width)
    jax.block_until_ready(out)
    jax.block_until_ready(new_V)
    assert out.shape == (8, 8)
    assert new_V.shape == res
    assert bool(jnp.all(jnp.isfinite(out)))
    assert bool(jnp.all(jnp.isfinite(new_V)))
    print("KERNEL_OK")
</pallas_src>

<mosaic_0001>
module attributes {stable_mosaic.version = 11 : i64} {
  func.func @_laplace_kernel(%arg0: memref<24x128xf32, #tpu.memory_space<vmem>>, %arg1: memref<24x128xf32, #tpu.memory_space<vmem>>, %arg2: memref<24x128xf32, #tpu.memory_space<vmem>>, %arg3: memref<24x128xf32, #tpu.memory_space<vmem>>, %arg4: memref<2x128xf32, #tpu.memory_space<vmem>>, %arg5: memref<24x128xf32, #tpu.memory_space<vmem>>, %arg6: memref<1x128xf32, #tpu.memory_space<vmem>>) attributes {dimension_semantics = [], scalar_prefetch = 0 : i64, scratch_operands = 0 : i64, tpu.core_type = #tpu.core_type<tc>} {
    %c0 = arith.constant 0 : index
    %c0_0 = arith.constant 0 : index
    %0 = vector.load %arg2[%c0, %c0_0] : memref<24x128xf32, #tpu.memory_space<vmem>>, vector<24x128xf32>
    %c0_1 = arith.constant 0 : index
    %c0_2 = arith.constant 0 : index
    %1 = vector.load %arg3[%c0_1, %c0_2] : memref<24x128xf32, #tpu.memory_space<vmem>>, vector<24x128xf32>
    %cst = arith.constant 0.000000e+00 : f32
    %2 = vector.broadcast %cst : f32 to vector<24x128xf32>
    %3 = arith.cmpf ogt, %0, %2 : vector<24x128xf32>
    %c0_3 = arith.constant 0 : index
    %c0_4 = arith.constant 0 : index
    %4 = vector.load %arg0[%c0_3, %c0_4] : memref<24x128xf32, #tpu.memory_space<vmem>>, vector<24x128xf32>
    %5 = arith.select %3, %1, %4 : vector<24x128xi1>, vector<24x128xf32>
    %c0_5 = arith.constant 0 : index
    %c0_6 = arith.constant 0 : index
    %6 = vector.load %arg1[%c0_5, %c0_6] : memref<24x128xf32, #tpu.memory_space<vmem>>, vector<24x128xf32>
    %cst_7 = arith.constant 0.000000e+00 : f32
    %7 = vector.broadcast %cst_7 : f32 to vector<24x128xf32>
    %8 = arith.maximumf %6, %7 : vector<24x128xf32>
    %cst_8 = arith.constant 1.000000e+00 : f32
    %9 = vector.broadcast %cst_8 : f32 to vector<24x128xf32>
    %10 = arith.addf %8, %9 : vector<24x128xf32>
    %cst_9 = arith.constant 0.000000e+00 : f32
    %11 = vector.broadcast %cst_9 : f32 to vector<24x128xf32>
    %12 = arith.cmpf oeq, %0, %11 : vector<24x128xf32>
    %cst_10 = arith.constant 1.000000e+00 : f32
    %13 = vector.broadcast %cst_10 : f32 to vector<24x128xf32>
    %14 = arith.cmpf oeq, %0, %13 : vector<24x128xf32>
    %cst_11 = arith.constant 0.000000e+00 : f32
    %15 = vector.broadcast %cst_11 : f32 to vector<24x128xf32>
    %16 = arith.cmpf ogt, %1, %15 : vector<24x128xf32>
    %17 = arith.andi %14, %16 : vector<24x128xi1>
    %cst_12 = arith.constant 0.000000e+00 : f32
    %18 = vector.broadcast %cst_12 : f32 to vector<24x128xf32>
    %19 = arith.select %17, %1, %18 : vector<24x128xi1>, vector<24x128xf32>
    %20 = vector.extract_strided_slice %19 {offsets = [0, 127], sizes = [24, 1], strides = [1, 1]} : vector<24x128xf32> to vector<24x1xf32>
    %21 = vector.extract_strided_slice %19 {offsets = [0, 0], sizes = [24, 127], strides = [1, 1]} : vector<24x128xf32> to vector<24x127xf32>
    %22 = tpu.concatenate %20, %21 in 1 : vector<24x1xf32>, vector<24x127xf32> -> vector<24x128xf32>
    %23 = arith.addf %19, %22 : vector<24x128xf32>
    %24 = vector.extract_strided_slice %19 {offsets = [0, 1], sizes = [24, 127], strides = [1, 1]} : vector<24x128xf32> to vector<24x127xf32>
    %25 = vector.extract_strided_slice %19 {offsets = [0, 0], sizes = [24, 1], strides = [1, 1]} : vector<24x128xf32> to vector<24x1xf32>
    %26 = tpu.concatenate %24, %25 in 1 : vector<24x127xf32>, vector<24x1xf32> -> vector<24x128xf32>
    %27 = arith.addf %23, %26 : vector<24x128xf32>
    %28 = vector.extract_strided_slice %27 {offsets = [23, 0], sizes = [1, 128], strides = [1, 1]} : vector<24x128xf32> to vector<1x128xf32>
    %29 = vector.extract_strided_slice %27 {offsets = [0, 0], sizes = [23, 128], strides = [1, 1]} : vector<24x128xf32> to vector<23x128xf32>
    %30 = tpu.concatenate %28, %29 in 0 : vector<1x128xf32>, vector<23x128xf32> -> vector<24x128xf32>
    %31 = arith.addf %27, %30 : vector<24x128xf32>
    %32 = vector.extract_strided_slice %27 {offsets = [1, 0], sizes = [23, 128], strides = [1, 1]} : vector<24x128xf32> to vector<23x128xf32>
    %33 = vector.extract_strided_slice %27 {offsets = [0, 0], sizes = [1, 128], strides = [1, 1]} : vector<24x128xf32> to vector<1x128xf32>
    %34 = tpu.concatenate %32, %33 in 0 : vector<23x128xf32>, vector<1x128xf32> -> vector<24x128xf32>
    %35 = arith.addf %31, %34 : vector<24x128xf32>
    %cst_13 = arith.constant 0.111111112 : f32
    %36 = vector.broadcast %cst_13 : f32 to vector<24x128xf32>
    %37 = arith.mulf %35, %36 : vector<24x128xf32>
    %cst_14 = arith.constant 0.000000e+00 : f32
    %38 = vector.broadcast %cst_14 : f32 to vector<24x128xf32>
    %39 = arith.select %12, %37, %38 : vector<24x128xi1>, vector<24x128xf32>
    %40 = arith.addf %10, %39 : vector<24x128xf32>
    %cst_15 = arith.constant 1.000000e+30 : f32
    %41 = vector.broadcast %cst_15 : f32 to vector<24x128xf32>
    %42 = arith.select %12, %40, %41 : vector<24x128xi1>, vector<24x128xf32>
    %cst_16 = arith.constant 1.41421354 : f32
    %43 = vector.broadcast %cst_16 : f32 to vector<24x128xf32>
    %44 = arith.mulf %40, %43 : vector<24x128xf32>
    %cst_17 = arith.constant 1.000000e+30 : f32
    %45 = vector.broadcast %cst_17 : f32 to vector<24x128xf32>
    %46 = arith.select %12, %44, %45 : vector<24x128xi1>, vector<24x128xf32>
    %c0_i32 = arith.constant 0 : i32
    %47 = vector.extract_strided_slice %5 {offsets = [23, 0], sizes = [1, 128], strides = [1, 1]} : vector<24x128xf32> to vector<1x128xf32>
    %48 = vector.extract_strided_slice %5 {offsets = [0, 0], sizes = [23, 128], strides = [1, 1]} : vector<24x128xf32> to vector<23x128xf32>
    %49 = tpu.concatenate %47, %48 in 0 : vector<1x128xf32>, vector<23x128xf32> -> vector<24x128xf32>
    %50 = vector.extract_strided_slice %5 {offsets = [1, 0], sizes = [23, 128], strides = [1, 1]} : vector<24x128xf32> to vector<23x128xf32>
    %51 = vector.extract_strided_slice %5 {offsets = [0, 0], sizes = [1, 128], strides = [1, 1]} : vector<24x128xf32> to vector<1x128xf32>
    %52 = tpu.concatenate %50, %51 in 0 : vector<23x128xf32>, vector<1x128xf32> -> vector<24x128xf32>
    %53 = arith.minimumf %49, %52 : vector<24x128xf32>
    %54 = vector.extract_strided_slice %5 {offsets = [0, 127], sizes = [24, 1], strides = [1, 1]} : vector<24x128xf32> to vector<24x1xf32>
    %55 = vector.extract_strided_slice %5 {offsets = [0, 0], sizes = [24, 127], strides = [1, 1]} : vector<24x128xf32> to vector<24x127xf32>
    %56 = tpu.concatenate %54, %55 in 1 : vector<24x1xf32>, vector<24x127xf32> -> vector<24x128xf32>
    %57 = vector.extract_strided_slice %5 {offsets = [0, 1], sizes = [24, 127], strides = [1, 1]} : vector<24x128xf32> to vector<24x127xf32>
    %58 = vector.extract_strided_slice %5 {offsets = [0, 0], sizes = [24, 1], strides = [1, 1]} : vector<24x128xf32> to vector<24x1xf32>
    %59 = tpu.concatenate %57, %58 in 1 : vector<24x127xf32>, vector<24x1xf32> -> vector<24x128xf32>
    %60 = arith.minimumf %56, %59 : vector<24x128xf32>
    %61 = arith.minimumf %60, %53 : vector<24x128xf32>
    %62 = vector.extract_strided_slice %53 {offsets = [0, 127], sizes = [24, 1], strides = [1, 1]} : vector<24x128xf32> to vector<24x1xf32>
    %63 = vector.extract_strided_slice %53 {offsets = [0, 0], sizes = [24, 127], strides = [1, 1]} : vector<24x128xf32> to vector<24x127xf32>
    %64 = tpu.concatenate %62, %63 in 1 : vector<24x1xf32>, vector<24x127xf32> -> vector<24x128xf32>
    %65 = vector.extract_strided_slice %53 {offsets = [0, 1], sizes = [24, 127], strides = [1, 1]} : vector<24x128xf32> to vector<24x127xf32>
    %66 = vector.extract_strided_slice %53 {offsets = [0, 0], sizes = [24, 1], strides = [1, 1]} : vector<24x128xf32> to vector<24x1xf32>
    %67 = tpu.concatenate %65, %66 in 1 : vector<24x127xf32>, vector<24x1xf32> -> vector<24x128xf32>
    %68 = arith.minimumf %64, %67 : vector<24x128xf32>
    %69 = arith.addf %61, %42 : vector<24x128xf32>
    %70 = arith.addf %68, %46 : vector<24x128xf32>
    %71 = arith.minimumf %69, %70 : vector<24x128xf32>
    %72 = arith.minimumf %5, %71 : vector<24x128xf32>
    %c1_i32 = arith.constant 1 : i32
    %73 = vector.extract_strided_slice %72 {offsets = [23, 0], sizes = [1, 128], strides = [1, 1]} : vector<24x128xf32> to vector<1x128xf32>
    %74 = vector.extract_strided_slice %72 {offsets = [0, 0], sizes = [23, 128], strides = [1, 1]} : vector<24x128xf32> to vector<23x128xf32>
    %75 = tpu.concatenate %73, %74 in 0 : vector<1x128xf32>, vector<23x128xf32> -> vector<24x128xf32>
    %76 = vector.extract_strided_slice %72 {offsets = [1, 0], sizes = [23, 128], strides = [1, 1]} : vector<24x128xf32> to vector<23x128xf32>
    %77 = vector.extract_strided_slice %72 {offsets = [0, 0], sizes = [1, 128], strides = [1, 1]} : vector<24x128xf32> to vector<1x128xf32>
    %78 = tpu.concatenate %76, %77 in 0 : vector<23x128xf32>, vector<1x128xf32> -> vector<24x128xf32>
    %79 = arith.minimumf %75, %78 : vector<24x128xf32>
    %80 = vector.extract_strided_slice %72 {offsets = [0, 127], sizes = [24, 1], strides = [1, 1]} : vector<24x128xf32> to vector<24x1xf32>
    %81 = vector.extract_strided_slice %72 {offsets = [0, 0], sizes = [24, 127], strides = [1, 1]} : vector<24x128xf32> to vector<24x127xf32>
    %82 = tpu.concatenate %80, %81 in 1 : vector<24x1xf32>, vector<24x127xf32> -> vector<24x128xf32>
    %83 = vector.extract_strided_slice %72 {offsets = [0, 1], sizes = [24, 127], strides = [1, 1]} : vector<24x128xf32> to vector<24x127xf32>
    %84 = vector.extract_strided_slice %72 {offsets = [0, 0], sizes = [24, 1], strides = [1, 1]} : vector<24x128xf32> to vector<24x1xf32>
    %85 = tpu.concatenate %83, %84 in 1 : vector<24x127xf32>, vector<24x1xf32> -> vector<24x128xf32>
    %86 = arith.minimumf %82, %85 : vector<24x128xf32>
    %87 = arith.minimumf %86, %79 : vector<24x128xf32>
    %88 = vector.extract_strided_slice %79 {offsets = [0, 127], sizes = [24, 1], strides = [1, 1]} : vector<24x128xf32> to vector<24x1xf32>
    %89 = vector.extract_strided_slice %79 {offsets = [0, 0], sizes = [24, 127], strides = [1, 1]} : vector<24x128xf32> to vector<24x127xf32>
    %90 = tpu.concatenate %88, %89 in 1 : vector<24x1xf32>, vector<24x127xf32> -> vector<24x128xf32>
    %91 = vector.extract_strided_slice %79 {offsets = [0, 1], sizes = [24, 127], strides = [1, 1]} : vector<24x128xf32> to vector<24x127xf32>
    %92 = vector.extract_strided_slice %79 {offsets = [0, 0], sizes = [24, 1], strides = [1, 1]} : vector<24x128xf32> to vector<24x1xf32>
    %93 = tpu.concatenate %91, %92 in 1 : vector<24x127xf32>, vector<24x1xf32> -> vector<24x128xf32>
    %94 = arith.minimumf %90, %93 : vector<24x128xf32>
    %95 = arith.addf %87, %42 : vector<24x128xf32>
    %96 = arith.addf %94, %46 : vector<24x128xf32>
    %97 = arith.minimumf %95, %96 : vector<24x128xf32>
    %98 = arith.minimumf %72, %97 : vector<24x128xf32>
    %c2_i32 = arith.constant 2 : i32
    %99 = vector.extract_strided_slice %98 {offsets = [23, 0], sizes = [1, 128], strides = [1, 1]} : vector<24x128xf32> to vector<1x128xf32>
    %100 = vector.extract_strided_slice %98 {offsets = [0, 0], sizes = [23, 128], strides = [1, 1]} : vector<24x128xf32> to vector<23x128xf32>
    %101 = tpu.concatenate %99, %100 in 0 : vector<1x128xf32>, vector<23x128xf32> -> vector<24x128xf32>
    %102 = vector.extract_strided_slice %98 {offsets = [1, 0], sizes = [23, 128], strides = [1, 1]} : vector<24x128xf32> to vector<23x128xf32>
    %103 = vector.extract_strided_slice %98 {offsets = [0, 0], sizes = [1, 128], strides = [1, 1]} : vector<24x128xf32> to vector<1x128xf32>
    %104 = tpu.concatenate %102, %103 in 0 : vector<23x128xf32>, vector<1x128xf32> -> vector<24x128xf32>
    %105 = arith.minimumf %101, %104 : vector<24x128xf32>
    %106 = vector.extract_strided_slice %98 {offsets = [0, 127], sizes = [24, 1], strides = [1, 1]} : vector<24x128xf32> to vector<24x1xf32>
    %107 = vector.extract_strided_slice %98 {offsets = [0, 0], sizes = [24, 127], strides = [1, 1]} : vector<24x128xf32> to vector<24x127xf32>
    %108 = tpu.concatenate %106, %107 in 1 : vector<24x1xf32>, vector<24x127xf32> -> vector<24x128xf32>
    %109 = vector.extract_strided_slice %98 {offsets = [0, 1], sizes = [24, 127], strides = [1, 1]} : vector<24x128xf32> to vector<24x127xf32>
    %110 = vector.extract_strided_slice %98 {offsets = [0, 0], sizes = [24, 1], strides = [1, 1]} : vector<24x128xf32> to vector<24x1xf32>
    %111 = tpu.concatenate %109, %110 in 1 : vector<24x127xf32>, vector<24x1xf32> -> vector<24x128xf32>
    %112 = arith.minimumf %108, %111 : vector<24x128xf32>
    %113 = arith.minimumf %112, %105 : vector<24x128xf32>
    %114 = vector.extract_strided_slice %105 {offsets = [0, 127], sizes = [24, 1], strides = [1, 1]} : vector<24x128xf32> to vector<24x1xf32>
    %115 = vector.extract_strided_slice %105 {offsets = [0, 0], sizes = [24, 127], strides = [1, 1]} : vector<24x128xf32> to vector<24x127xf32>
    %116 = tpu.concatenate %114, %115 in 1 : vector<24x1xf32>, vector<24x127xf32> -> vector<24x128xf32>
    %117 = vector.extract_strided_slice %105 {offsets = [0, 1], sizes = [24, 127], strides = [1, 1]} : vector<24x128xf32> to vector<24x127xf32>
    %118 = vector.extract_strided_slice %105 {offsets = [0, 0], sizes = [24, 1], strides = [1, 1]} : vector<24x128xf32> to vector<24x1xf32>
    %119 = tpu.concatenate %117, %118 in 1 : vector<24x127xf32>, vector<24x1xf32> -> vector<24x128xf32>
    %120 = arith.minimumf %116, %119 : vector<24x128xf32>
    %121 = arith.addf %113, %42 : vector<24x128xf32>
    %122 = arith.addf %120, %46 : vector<24x128xf32>
    %123 = arith.minimumf %121, %122 : vector<24x128xf32>
    %124 = arith.minimumf %98, %123 : vector<24x128xf32>
    %c3_i32 = arith.constant 3 : i32
    %125 = vector.extract_strided_slice %124 {offsets = [23, 0], sizes = [1, 128], strides = [1, 1]} : vector<24x128xf32> to vector<1x128xf32>
    %126 = vector.extract_strided_slice %124 {offsets = [0, 0], sizes = [23, 128], strides = [1, 1]} : vector<24x128xf32> to vector<23x128xf32>
    %127 = tpu.concatenate %125, %126 in 0 : vector<1x128xf32>, vector<23x128xf32> -> vector<24x128xf32>
    %128 = vector.extract_strided_slice %124 {offsets = [1, 0], sizes = [23, 128], strides = [1, 1]} : vector<24x128xf32> to vector<23x128xf32>
    %129 = vector.extract_strided_slice %124 {offsets = [0, 0], sizes = [1, 128], strides = [1, 1]} : vector<24x128xf32> to vector<1x128xf32>
    %130 = tpu.concatenate %128, %129 in 0 : vector<23x128xf32>, vector<1x128xf32> -> vector<24x128xf32>
    %131 = arith.minimumf %127, %130 : vector<24x128xf32>
    %132 = vector.extract_strided_slice %124 {offsets = [0, 127], sizes = [24, 1], strides = [1, 1]} : vector<24x128xf32> to vector<24x1xf32>
    %133 = vector.extract_strided_slice %124 {offsets = [0, 0], sizes = [24, 127], strides = [1, 1]} : vector<24x128xf32> to vector<24x127xf32>
    %134 = tpu.concatenate %132, %133 in 1 : vector<24x1xf32>, vector<24x127xf32> -> vector<24x128xf32>
    %135 = vector.extract_strided_slice %124 {offsets = [0, 1], sizes = [24, 127], strides = [1, 1]} : vector<24x128xf32> to vector<24x127xf32>
    %136 = vector.extract_strided_slice %124 {offsets = [0, 0], sizes = [24, 1], strides = [1, 1]} : vector<24x128xf32> to vector<24x1xf32>
    %137 = tpu.concatenate %135, %136 in 1 : vector<24x127xf32>, vector<24x1xf32> -> vector<24x128xf32>
    %138 = arith.minimumf %134, %137 : vector<24x128xf32>
    %139 = arith.minimumf %138, %131 : vector<24x128xf32>
    %140 = vector.extract_strided_slice %131 {offsets = [0, 127], sizes = [24, 1], strides = [1, 1]} : vector<24x128xf32> to vector<24x1xf32>
    %141 = vector.extract_strided_slice %131 {offsets = [0, 0], sizes = [24, 127], strides = [1, 1]} : vector<24x128xf32> to vector<24x127xf32>
    %142 = tpu.concatenate %140, %141 in 1 : vector<24x1xf32>, vector<24x127xf32> -> vector<24x128xf32>
    %143 = vector.extract_strided_slice %131 {offsets = [0, 1], sizes = [24, 127], strides = [1, 1]} : vector<24x128xf32> to vector<24x127xf32>
    %144 = vector.extract_strided_slice %131 {offsets = [0, 0], sizes = [24, 1], strides = [1, 1]} : vector<24x128xf32> to vector<24x1xf32>
    %145 = tpu.concatenate %143, %144 in 1 : vector<24x127xf32>, vector<24x1xf32> -> vector<24x128xf32>
    %146 = arith.minimumf %142, %145 : vector<24x128xf32>
    %147 = arith.addf %139, %42 : vector<24x128xf32>
    %148 = arith.addf %146, %46 : vector<24x128xf32>
    %149 = arith.minimumf %147, %148 : vector<24x128xf32>
    %150 = arith.minimumf %124, %149 : vector<24x128xf32>
    %c4_i32 = arith.constant 4 : i32
    %151 = vector.extract_strided_slice %150 {offsets = [23, 0], sizes = [1, 128], strides = [1, 1]} : vector<24x128xf32> to vector<1x128xf32>
    %152 = vector.extract_strided_slice %150 {offsets = [0, 0], sizes = [23, 128], strides = [1, 1]} : vector<24x128xf32> to vector<23x128xf32>
    %153 = tpu.concatenate %151, %152 in 0 : vector<1x128xf32>, vector<23x128xf32> -> vector<24x128xf32>
    %154 = vector.extract_strided_slice %150 {offsets = [1, 0], sizes = [23, 128], strides = [1, 1]} : vector<24x128xf32> to vector<23x128xf32>
    %155 = vector.extract_strided_slice %150 {offsets = [0, 0], sizes = [1, 128], strides = [1, 1]} : vector<24x128xf32> to vector<1x128xf32>
    %156 = tpu.concatenate %154, %155 in 0 : vector<23x128xf32>, vector<1x128xf32> -> vector<24x128xf32>
    %157 = arith.minimumf %153, %156 : vector<24x128xf32>
    %158 = vector.extract_strided_slice %150 {offsets = [0, 127], sizes = [24, 1], strides = [1, 1]} : vector<24x128xf32> to vector<24x1xf32>
    %159 = vector.extract_strided_slice %150 {offsets = [0, 0], sizes = [24, 127], strides = [1, 1]} : vector<24x128xf32> to vector<24x127xf32>
    %160 = tpu.concatenate %158, %159 in 1 : vector<24x1xf32>, vector<24x127xf32> -> vector<24x128xf32>
    %161 = vector.extract_strided_slice %150 {offsets = [0, 1], sizes = [24, 127], strides = [1, 1]} : vector<24x128xf32> to vector<24x127xf32>
    %162 = vector.extract_strided_slice %150 {offsets = [0, 0], sizes = [24, 1], strides = [1, 1]} : vector<24x128xf32> to vector<24x1xf32>
    %163 = tpu.concatenate %161, %162 in 1 : vector<24x127xf32>, vector<24x1xf32> -> vector<24x128xf32>
    %164 = arith.minimumf %160, %163 : vector<24x128xf32>
    %165 = arith.minimumf %164, %157 : vector<24x128xf32>
    %166 = vector.extract_strided_slice %157 {offsets = [0, 127], sizes = [24, 1], strides = [1, 1]} : vector<24x128xf32> to vector<24x1xf32>
    %167 = vector.extract_strided_slice %157 {offsets = [0, 0], sizes = [24, 127], strides = [1, 1]} : vector<24x128xf32> to vector<24x127xf32>
    %168 = tpu.concatenate %166, %167 in 1 : vector<24x1xf32>, vector<24x127xf32> -> vector<24x128xf32>
    %169 = vector.extract_strided_slice %157 {offsets = [0, 1], sizes = [24, 127], strides = [1, 1]} : vector<24x128xf32> to vector<24x127xf32>
    %170 = vector.extract_strided_slice %157 {offsets = [0, 0], sizes = [24, 1], strides = [1, 1]} : vector<24x128xf32> to vector<24x1xf32>
    %171 = tpu.concatenate %169, %170 in 1 : vector<24x127xf32>, vector<24x1xf32> -> vector<24x128xf32>
    %172 = arith.minimumf %168, %171 : vector<24x128xf32>
    %173 = arith.addf %165, %42 : vector<24x128xf32>
    %174 = arith.addf %172, %46 : vector<24x128xf32>
    %175 = arith.minimumf %173, %174 : vector<24x128xf32>
    %176 = arith.minimumf %150, %175 : vector<24x128xf32>
    %c0_18 = arith.constant 0 : index
    %c0_19 = arith.constant 0 : index
    %177 = vector.load %arg5[%c0_18, %c0_19] : memref<24x128xf32, #tpu.memory_space<vmem>>, vector<24x128xf32>
    tpu.vector_store %arg5[%c0_18, %c0_19], %176 {strides = array<i32>} : memref<24x128xf32, #tpu.memory_space<vmem>>, vector<24x128xf32>,
    %c0_20 = arith.constant 0 : index
    %c0_21 = arith.constant 0 : index
    %178 = vector.load %arg4[%c0_20, %c0_21] : memref<2x128xf32, #tpu.memory_space<vmem>>, vector<1x128xf32>
    %c1 = arith.constant 1 : index
    %c0_22 = arith.constant 0 : index
    %179 = vector.load %arg4[%c1, %c0_22] : memref<2x128xf32, #tpu.memory_space<vmem>>, vector<1x128xf32>
    %cst_23 = arith.constant 1.000000e+00 : f32
    %180 = vector.broadcast %cst_23 : f32 to vector<1x128xf32>
    %181 = arith.addf %178, %180 : vector<1x128xf32>
    %cst_24 = arith.constant 5.000000e-01 : f32
    %182 = vector.broadcast %cst_24 : f32 to vector<1x128xf32>
    %183 = arith.mulf %181, %182 : vector<1x128xf32>
    %cst_25 = arith.constant 1.500000e+01 : f32
    %184 = vector.broadcast %cst_25 : f32 to vector<1x128xf32>
    %185 = arith.mulf %183, %184 : vector<1x128xf32>
    %cst_26 = arith.constant 0.000000e+00 : f32
    %cst_27 = arith.constant 1.500000e+01 : f32
    %186 = vector.broadcast %cst_26 : f32 to vector<1x128xf32>
    %187 = arith.maximumf %186, %185 : vector<1x128xf32>
    %188 = vector.broadcast %cst_27 : f32 to vector<1x128xf32>
    %189 = arith.minimumf %188, %187 : vector<1x128xf32>
    %cst_28 = arith.constant 1.000000e+00 : f32
    %190 = vector.broadcast %cst_28 : f32 to vector<1x128xf32>
    %191 = arith.addf %179, %190 : vector<1x128xf32>
    %cst_29 = arith.constant 5.000000e-01 : f32
    %192 = vector.broadcast %cst_29 : f32 to vector<1x128xf32>
    %193 = arith.mulf %191, %192 : vector<1x128xf32>
    %cst_30 = arith.constant 1.500000e+01 : f32
    %194 = vector.broadcast %cst_30 : f32 to vector<1x128xf32>
    %195 = arith.mulf %193, %194 : vector<1x128xf32>
    %cst_31 = arith.constant 0.000000e+00 : f32
    %cst_32 = arith.constant 1.500000e+01 : f32
    %196 = vector.broadcast %cst_31 : f32 to vector<1x128xf32>
    %197 = arith.maximumf %196, %195 : vector<1x128xf32>
    %198 = vector.broadcast %cst_32 : f32 to vector<1x128xf32>
    %199 = arith.minimumf %198, %197 : vector<1x128xf32>
    %200 = math.floor %189 : vector<1x128xf32>
    %201 = math.floor %199 : vector<1x128xf32>
    %202 = arith.subf %189, %200 : vector<1x128xf32>
    %cst_33 = arith.constant 1.000000e+00 : f32
    %203 = vector.broadcast %cst_33 : f32 to vector<1x128xf32>
    %204 = arith.subf %203, %202 : vector<1x128xf32>
    %205 = arith.subf %199, %201 : vector<1x128xf32>
    %cst_34 = arith.constant 1.000000e+00 : f32
    %206 = vector.broadcast %cst_34 : f32 to vector<1x128xf32>
    %207 = arith.subf %206, %205 : vector<1x128xf32>
    %208 = arith.fptosi %200 : vector<1x128xf32> to vector<1x128xi32>
    %209 = arith.fptosi %201 : vector<1x128xf32> to vector<1x128xi32>
    %c1_i32_35 = arith.constant 1 : i32
    %210 = vector.broadcast %c1_i32_35 : i32 to vector<1x128xi32>
    %211 = arith.addi %208, %210 : vector<1x128xi32>
    %c15_i32 = arith.constant 15 : i32
    %212 = vector.broadcast %c15_i32 : i32 to vector<1x128xi32>
    %213 = arith.minsi %211, %212 : vector<1x128xi32>
    %c1_i32_36 = arith.constant 1 : i32
    %214 = vector.broadcast %c1_i32_36 : i32 to vector<1x128xi32>
    %215 = arith.addi %209, %214 : vector<1x128xi32>
    %c15_i32_37 = arith.constant 15 : i32
    %216 = vector.broadcast %c15_i32_37 : i32 to vector<1x128xi32>
    %217 = arith.minsi %215, %216 : vector<1x128xi32>
    %cst_38 = arith.constant -1.000000e+30 : f32
    %cst_39 = arith.constant 1.000000e+30 : f32
    %218 = vector.broadcast %cst_38 : f32 to vector<24x128xf32>
    %219 = arith.maximumf %218, %176 : vector<24x128xf32>
    %220 = vector.broadcast %cst_39 : f32 to vector<24x128xf32>
    %221 = arith.minimumf %220, %219 : vector<24x128xf32>
    %222 = tpu.iota {dimensions = array<i32: 0>} : vector<128x128xi32>
    %223 = vector.broadcast %208 : vector<1x128xi32> to vector<128x128xi32>
    %224 = arith.cmpi eq, %222, %223 : vector<128x128xi32>
    %cst_40 = arith.constant 0.000000e+00 : f32
    %225 = vector.shape_cast %204 : vector<1x128xf32> to vector<1x128xf32>
    %226 = vector.broadcast %225 : vector<1x128xf32> to vector<128x128xf32>
    %227 = vector.broadcast %cst_40 : f32 to vector<128x128xf32>
    %228 = arith.select %224, %226, %227 : vector<128x128xi1>, vector<128x128xf32>
    %229 = vector.broadcast %213 : vector<1x128xi32> to vector<128x128xi32>
    %230 = arith.cmpi eq, %222, %229 : vector<128x128xi32>
    %cst_41 = arith.constant 0.000000e+00 : f32
    %231 = vector.shape_cast %202 : vector<1x128xf32> to vector<1x128xf32>
    %232 = vector.broadcast %231 : vector<1x128xf32> to vector<128x128xf32>
    %233 = vector.broadcast %cst_41 : f32 to vector<128x128xf32>
    %234 = arith.select %230, %232, %233 : vector<128x128xi1>, vector<128x128xf32>
    %235 = arith.addf %228, %234 : vector<128x128xf32>
    %cst_42 = arith.constant dense<0.000000e+00> : vector<24x128xf32>
    %236 = tpu.matmul %221, %235, %cst_42 {dimension_numbers = #tpu.dot_dimension_numbers<[1], [0], [0], [1], [0, 0, 1, 1], [], []>} : vector<24x128xf32>, vector<128x128xf32>, vector<24x128xf32> -> vector<24x128xf32>
    %237 = tpu.iota {dimensions = array<i32: 0>} : vector<24x128xi32>
    %238 = vector.broadcast %209 : vector<1x128xi32> to vector<24x128xi32>
    %239 = arith.cmpi eq, %237, %238 : vector<24x128xi32>
    %cst_43 = arith.constant 0.000000e+00 : f32
    %240 = vector.shape_cast %207 : vector<1x128xf32> to vector<1x128xf32>
    %241 = vector.broadcast %240 : vector<1x128xf32> to vector<24x128xf32>
    %242 = vector.broadcast %cst_43 : f32 to vector<24x128xf32>
    %243 = arith.select %239, %241, %242 : vector<24x128xi1>, vector<24x128xf32>
    %244 = vector.broadcast %217 : vector<1x128xi32> to vector<24x128xi32>
    %245 = arith.cmpi eq, %237, %244 : vector<24x128xi32>
    %cst_44 = arith.constant 0.000000e+00 : f32
    %246 = vector.shape_cast %205 : vector<1x128xf32> to vector<1x128xf32>
    %247 = vector.broadcast %246 : vector<1x128xf32> to vector<24x128xf32>
    %248 = vector.broadcast %cst_44 : f32 to vector<24x128xf32>
    %249 = arith.select %245, %247, %248 : vector<24x128xi1>, vector<24x128xf32>
    %250 = arith.addf %243, %249 : vector<24x128xf32>
    %251 = arith.mulf %250, %236 : vector<24x128xf32>
    %cst_45 = arith.constant dense<0.000000e+00> : vector<128xf32>
    %252 = vector.multi_reduction <add>, %251, %cst_45 [0] : vector<24x128xf32> to vector<128xf32>
    %253 = vector.shape_cast %252 : vector<128xf32> to vector<1x128xf32>
    %c0_46 = arith.constant 0 : index
    %c0_47 = arith.constant 0 : index
    %254 = vector.load %arg6[%c0_46, %c0_47] : memref<1x128xf32, #tpu.memory_space<vmem>>, vector<1x128xf32>
    tpu.vector_store %arg6[%c0_46, %c0_47], %253 {strides = array<i32>} : memref<1x128xf32, #tpu.memory_space<vmem>>, vector<1x128xf32>,
    return
  }
}

</mosaic_0001>

<llo_original>
// kernel: tpu_custom_call.1
$region0: #{tpu_custom_call.1}
  #allocation0 [shape = 'u32[]', space=smem, size = 0x4, offset = 0x4, fixed_abs, tag = 'smem constant byte address 0x4 - core index']
  #allocation1 [shape = 'u32[144,128]{1,0:T(1,128)}', space=vmem, size = 0x12000, scoped, tag = 'internal scratch']
  %s0 = inlined_call_operand.hbm [shape: f32[24,128], index: 0, kind: input, shape index: {}, may-alias: {0,5}]
  %s1 = inlined_call_operand.vmem [shape: f32[24,128], index: 1, kind: input, shape index: {}]
  %s2 = inlined_call_operand.vmem [shape: f32[24,128], index: 2, kind: input, shape index: {}]
  %s3 = inlined_call_operand.hbm [shape: f32[24,128], index: 3, kind: input, shape index: {}]
  %s4 = inlined_call_operand.vmem [shape: f32[2,128], index: 4, kind: input, shape index: {}]
  %s5 = inlined_call_operand.hbm [shape: f32[24,128], index: 5, kind: output, shape index: {0}, may-alias: {0,5}]
  %s6 = inlined_call_operand.hbm [shape: f32[1,128], index: 6, kind: output, shape index: {1}]
  %7 = xla_tuple %s5, %s6
  %s8 = sld [smem:[#allocation0]]
  $region46: #{tpu_custom_call.1} parent=0
    _
  %s10 = ssub.s32 1, %s8
  %s11 = scalar_select 0, %s10, %s8
  $region1: #{tpu_custom_call.1} parent=0
    #allocation2 [shape = 'u8[12288]{0}', space=vmem, size = 0x3000, scoped, tag = 'input window, operand 0, single buffered']
    #allocation3 [shape = 's32[1]{0}', space=sflag, size = 0x4, scoped, tag = 'scoped memory for tpu_custom_call.1']
    #allocation4 [shape = 's32[1]{0}', space=sflag, size = 0x4, scoped, tag = 'scoped memory for tpu_custom_call.1']
    #allocation5 [shape = 'u8[12288]{0}', space=vmem, size = 0x3000, scoped, tag = 'input window, operand 3, single buffered']
    #allocation6 [shape = 's32[1]{0}', space=sflag, size = 0x4, scoped, tag = 'scoped memory for tpu_custom_call.1']
    #allocation7 [shape = 'u8[12288]{0}', space=vmem, size = 0x3000, scoped, tag = 'output window, operand 0, single buffered']
    #allocation8 [shape = 'u8[512]{0}', space=vmem, size = 0x400, scoped, tag = 'output window, operand 1, single buffered']
    #allocation9 [shape = 's32[1]{0}', space=sflag, size = 0x4, scoped, tag = 'scoped memory for tpu_custom_call.1']
    %12 = vsyncpa [#allocation3], 0
    %13 = vsyncpa [#allocation6], 0
    %14 = vsyncpa [#allocation4], 0
    %15 = vsyncpa [#allocation9], 0
    // Predicated region
    $region2: #{tpu_custom_call.1} parent=1 // pred_check
      _
    $region3: #{tpu_custom_call.1} parent=1 // pred_check_branch
      %17 = sbr.rel (0) target = $region5
    $region4: #{tpu_custom_call.1} parent=1 // pred_region
      %s19 = ssub.s32 384, 384
      %20 = vsyncadd [#allocation3], %s19
      %s21 = sshll.u32 [#allocation2], 4
      %s22 = int_to_ptr.vmem [resolvable:$true] %s21
      %27 = dma.hbm_to_vmem [thread:$0]  %s0, 384, %s22, [#allocation3], 128, 128, 8
    $region5: #{tpu_custom_call.1} parent=1 // pred_fallthru
      _
    // Predicated region
    $region6: #{tpu_custom_call.1} parent=1 // pred_check
      _
    $region7: #{tpu_custom_call.1} parent=1 // pred_check_branch
      %29 = sbr.rel (0) target = $region9
    $region8: #{tpu_custom_call.1} parent=1 // pred_region
      _
    $region9: #{tpu_custom_call.1} parent=1 // pred_fallthru
      _
    // Predicated region
    $region10: #{tpu_custom_call.1} parent=1 // pred_check
      _
    $region11: #{tpu_custom_call.1} parent=1 // pred_check_branch
      %31 = sbr.rel (0) target = $region13
    $region12: #{tpu_custom_call.1} parent=1 // pred_region
      _
    $region13: #{tpu_custom_call.1} parent=1 // pred_fallthru
      _
    // Predicated region
    $region14: #{tpu_custom_call.1} parent=1 // pred_check
      _
    $region15: #{tpu_custom_call.1} parent=1 // pred_check_branch
      %33 = sbr.rel (0) target = $region17
    $region16: #{tpu_custom_call.1} parent=1 // pred_region
      %s35 = ssub.s32 384, 384
      %36 = vsyncadd [#allocation6], %s35
      %s37 = sshll.u32 [#allocation5], 4
      %s38 = int_to_ptr.vmem [resolvable:$true] %s37
      %43 = dma.hbm_to_vmem [thread:$0]  %s3, 384, %s38, [#allocation6], 128, 128, 8
    $region17: #{tpu_custom_call.1} parent=1 // pred_fallthru
      _
    // Predicated region
    $region18: #{tpu_custom_call.1} parent=1 // pred_check
      _
    $region19: #{tpu_custom_call.1} parent=1 // pred_check_branch
      %45 = sbr.rel (0) target = $region21
    $region20: #{tpu_custom_call.1} parent=1 // pred_region
      _
    $region21: #{tpu_custom_call.1} parent=1 // pred_fallthru
      _
    // Predicated region
    $region22: #{tpu_custom_call.1} parent=1 // pred_check
      _
    $region23: #{tpu_custom_call.1} parent=1 // pred_check_branch
      %47 = sbr.rel (0) target = $region25
    $region24: #{tpu_custom_call.1} parent=1 // pred_region
      %48 = dma.done [#allocation3], 384
    $region25: #{tpu_custom_call.1} parent=1 // pred_fallthru
      _
    // Predicated region
    $region26: #{tpu_custom_call.1} parent=1 // pred_check
      _
    $region27: #{tpu_custom_call.1} parent=1 // pred_check_branch
      %50 = sbr.rel (0) target = $region29
    $region28: #{tpu_custom_call.1} parent=1 // pred_region
      %51 = dma.done [#allocation6], 384
    $region29: #{tpu_custom_call.1} parent=1 // pred_fallthru
      _
    %v52 = vld [vmem:[%s2] sm:$0xff]
    %v53 = vld [vmem:[%s2 + $0x8] sm:$0xff]
    %v54 = vld [vmem:[%s2 + $0x10] sm:$0xff]
    %v55 = vld [vmem:[#allocation5] sm:$0xff]
    %v56 = vld [vmem:[#allocation5 + $0x8] sm:$0xff]
    %v57 = vld [vmem:[#allocation5 + $0x10] sm:$0xff]
    %vm58 = vcmp.gt.f32.partialorder %v52, 0.0
    %vm59 = vcmp.gt.f32.partialorder %v53, 0.0
    %vm60 = vcmp.gt.f32.partialorder %v54, 0.0
    %v61 = vld [vmem:[#allocation2] sm:$0xff]
    %v62 = vld [vmem:[#allocation2 + $0x8] sm:$0xff]
    %v63 = vld [vmem:[#allocation2 + $0x10] sm:$0xff]
    %v64 = vsel %vm58, %v55, %v61
    %v65 = vsel %vm59, %v56, %v62
    %v66 = vsel %vm60, %v57, %v63
    %v67 = vld [vmem:[%s1] sm:$0xff]
    %v68 = vld [vmem:[%s1 + $0x8] sm:$0xff]
    %v69 = vld [vmem:[%s1 + $0x10] sm:$0xff]
    %v70 = vmax.f32 %v67, 0.0
    %v71 = vmax.f32 %v68, 0.0
    %v72 = vmax.f32 %v69, 0.0
    %v73 = vadd.f32 %v70, 1.0
    %v74 = vadd.f32 %v71, 1.0
    %v75 = vadd.f32 %v72, 1.0
    %vm76 = vcmp.eq.f32.partialorder %v52, 0.0
    %vm77 = vcmp.eq.f32.partialorder %v53, 0.0
    %vm78 = vcmp.eq.f32.partialorder %v54, 0.0
    %vm79 = vcmp.eq.f32.partialorder %v52, 1.0
    %vm80 = vcmp.eq.f32.partialorder %v53, 1.0
    %vm81 = vcmp.eq.f32.partialorder %v54, 1.0
    %vm82 = vcmp.gt.f32.partialorder %v55, 0.0
    %vm83 = vcmp.gt.f32.partialorder %v56, 0.0
    %vm84 = vcmp.gt.f32.partialorder %v57, 0.0
    %vm85 = vmand %vm79, %vm82
    %vm86 = vmand %vm80, %vm83
    %vm87 = vmand %vm81, %vm84
    %v88 = vsel %vm85, %v55, 0.0
    %v89 = vsel %vm86, %v56, 0.0
    %v90 = vsel %vm87, %v57, 0.0
    %94 = vrot.lane.b32.xlu0 %v88, 1
    %v95 = vpop.permute.xlu0 %94
    %96 = vrot.lane.b32.xlu0 %v89, 1
    %v97 = vpop.permute.xlu0 %96
    %98 = vrot.lane.b32.xlu0 %v90, 1
    %v99 = vpop.permute.xlu0 %98
    %v103 = vadd.f32 %v88, %v95
    %v104 = vadd.f32 %v89, %v97
    %v105 = vadd.f32 %v90, %v99
    %106 = vrot.lane.b32.xlu0 %v88, 127
    %v107 = vpop.permute.xlu0 %106
    %108 = vrot.lane.b32.xlu0 %v89, 127
    %v109 = vpop.permute.xlu0 %108
    %110 = vrot.lane.b32.xlu0 %v90, 127
    %v111 = vpop.permute.xlu0 %110
    %v115 = vadd.f32 %v103, %v107
    %v116 = vadd.f32 %v104, %v109
    %v117 = vadd.f32 %v105, %v111
    %v119 = vrot.slane %v117, 7
    %vm123 = vcmask 1040384
    %v124 = vrot.slane %v115, 7
    %v125 = vrot.slane %v116, 7
    %v126 = vsel %vm123, %v124, %v125
    %v127 = vsel %vm123, %v125, %v119
    %v131 = vsel %vm123, %v119, %v124
    %v132 = vadd.f32 %v115, %v131
    %v133 = vadd.f32 %v116, %v126
    %v134 = vadd.f32 %v117, %v127
    %vm135 = vcmask 1046528
    %v136 = vrot.slane %v115, 1
    %v137 = vrot.slane %v116, 1
    %v138 = vsel %vm135, %v136, %v137
    %v139 = vrot.slane %v117, 1
    %v140 = vsel %vm135, %v137, %v139
    %v145 = vsel %vm135, %v139, %v136
    %v146 = vadd.f32 %v132, %v138
    %v147 = vadd.f32 %v133, %v140
    %v148 = vadd.f32 %v134, %v145
    %v149 = vmul.f32 %v146, 0.11111111
    %v150 = vmul.f32 %v147, 0.11111111
    %v151 = vmul.f32 %v148, 0.11111111
    %v152 = vsel %vm76, %v149, 0.0
    %v153 = vsel %vm77, %v150, 0.0
    %v154 = vsel %vm78, %v151, 0.0
    %v155 = vadd.f32 %v73, %v152
    %v156 = vadd.f32 %v74, %v153
    %v157 = vadd.f32 %v75, %v154
    %v158 = vsel %vm76, %v155, 1e+30
    %v159 = vsel %vm77, %v156, 1e+30
    %v160 = vsel %vm78, %v157, 1e+30
    %v161 = vmul.f32 %v155, 1.4142135
    %v162 = vmul.f32 %v156, 1.4142135
    %v163 = vmul.f32 %v157, 1.4142135
    %v164 = vsel %vm76, %v161, 1e+30
    %v165 = vsel %vm77, %v162, 1e+30
    %v166 = vsel %vm78, %v163, 1e+30
    %v168 = vrot.slane %v66, 7
    %v172 = vrot.slane %v64, 7
    %v173 = vrot.slane %v65, 7
    %v174 = vsel %vm123, %v172, %v173
    %v175 = vsel %vm123, %v173, %v168
    %v179 = vsel %vm123, %v168, %v172
    %v180 = vrot.slane %v64, 1
    %v181 = vrot.slane %v65, 1
    %v182 = vsel %vm135, %v180, %v181
    %v183 = vrot.slane %v66, 1
    %v184 = vsel %vm135, %v181, %v183
    %v189 = vsel %vm135, %v183, %v180
    %v190 = vmin.f32 %v179, %v182
    %v191 = vmin.f32 %v174, %v184
    %v192 = vmin.f32 %v175, %v189
    %193 = vrot.lane.b32.xlu0 %v64, 1
    %v194 = vpop.permute.xlu0 %193
    %195 = vrot.lane.b32.xlu0 %v65, 1
    %v196 = vpop.permute.xlu0 %195
    %197 = vrot.lane.b32.xlu0 %v66, 1
    %v198 = vpop.permute.xlu0 %197
    %202 = vrot.lane.b32.xlu0 %v64, 127
    %v203 = vpop.permute.xlu0 %202
    %204 = vrot.lane.b32.xlu0 %v65, 127
    %v205 = vpop.permute.xlu0 %204
    %206 = vrot.lane.b32.xlu0 %v66, 127
    %v207 = vpop.permute.xlu0 %206
    %v211 = vmin.f32 %v194, %v203
    %v212 = vmin.f32 %v196, %v205
    %v213 = vmin.f32 %v198, %v207
    %v214 = vmin.f32 %v211, %v190
    %v215 = vmin.f32 %v212, %v191
    %v216 = vmin.f32 %v213, %v192
    %220 = vrot.lane.b32.xlu0 %v190, 1
    %v221 = vpop.permute.xlu0 %220
    %222 = vrot.lane.b32.xlu0 %v191, 1
    %v223 = vpop.permute.xlu0 %222
    %224 = vrot.lane.b32.xlu0 %v192, 1
    %v225 = vpop.permute.xlu0 %224
    %229 = vrot.lane.b32.xlu0 %v190, 127
    %v230 = vpop.permute.xlu0 %229
    %231 = vrot.lane.b32.xlu0 %v191, 127
    %v232 = vpop.permute.xlu0 %231
    %233 = vrot.lane.b32.xlu0 %v192, 127
    %v234 = vpop.permute.xlu0 %233
    %v238 = vmin.f32 %v221, %v230
    %v239 = vmin.f32 %v223, %v232
    %v240 = vmin.f32 %v225, %v234
    %v241 = vadd.f32 %v214, %v158
    %v242 = vadd.f32 %v215, %v159
    %v243 = vadd.f32 %v216, %v160
    %v244 = vadd.f32 %v238, %v164
    %v245 = vadd.f32 %v239, %v165
    %v246 = vadd.f32 %v240, %v166
    %v247 = vmin.f32 %v241, %v244
    %v248 = vmin.f32 %v242, %v245
    %v249 = vmin.f32 %v243, %v246
    %v250 = vmin.f32 %v64, %v247
    %v251 = vmin.f32 %v65, %v248
    %v252 = vmin.f32 %v66, %v249
    %v254 = vrot.slane %v252, 7
    %v258 = vrot.slane %v250, 7
    %v259 = vrot.slane %v251, 7
    %v260 = vsel %vm123, %v258, %v259
    %v261 = vsel %vm123, %v259, %v254
    %v265 = vsel %vm123, %v254, %v258
    %v266 = vrot.slane %v250, 1
    %v267 = vrot.slane %v251, 1
    %v268 = vsel %vm135, %v266, %v267
    %v269 = vrot.slane %v252, 1
    %v270 = vsel %vm135, %v267, %v269
    %v275 = vsel %vm135, %v269, %v266
    %v276 = vmin.f32 %v265, %v268
    %v277 = vmin.f32 %v260, %v270
    %v278 = vmin.f32 %v261, %v275
    %279 = vrot.lane.b32.xlu0 %v250, 1
    %v280 = vpop.permute.xlu0 %279
    %281 = vrot.lane.b32.xlu0 %v251, 1
    %v282 = vpop.permute.xlu0 %281
    %283 = vrot.lane.b32.xlu0 %v252, 1
    %v284 = vpop.permute.xlu0 %283
    %288 = vrot.lane.b32.xlu0 %v250, 127
    %v289 = vpop.permute.xlu0 %288
    %290 = vrot.lane.b32.xlu0 %v251, 127
    %v291 = vpop.permute.xlu0 %290
    %292 = vrot.lane.b32.xlu0 %v252, 127
    %v293 = vpop.permute.xlu0 %292
    %v297 = vmin.f32 %v280, %v289
    %v298 = vmin.f32 %v282, %v291
    %v299 = vmin.f32 %v284, %v293
    %v300 = vmin.f32 %v297, %v276
    %v301 = vmin.f32 %v298, %v277
    %v302 = vmin.f32 %v299, %v278
    %306 = vrot.lane.b32.xlu0 %v276, 1
    %v307 = vpop.permute.xlu0 %306
    %308 = vrot.lane.b32.xlu0 %v277, 1
    %v309 = vpop.permute.xlu0 %308
    %310 = vrot.lane.b32.xlu0 %v278, 1
    %v311 = vpop.permute.xlu0 %310
    %315 = vrot.lane.b32.xlu0 %v276, 127
    %v316 = vpop.permute.xlu0 %315
    %317 = vrot.lane.b32.xlu0 %v277, 127
    %v318 = vpop.permute.xlu0 %317
    %319 = vrot.lane.b32.xlu0 %v278, 127
    %v320 = vpop.permute.xlu0 %319
    %v324 = vmin.f32 %v307, %v316
    %v325 = vmin.f32 %v309, %v318
    %v326 = vmin.f32 %v311, %v320
    %v327 = vadd.f32 %v300, %v158
    %v328 = vadd.f32 %v301, %v159
    %v329 = vadd.f32 %v302, %v160
    %v330 = vadd.f32 %v324, %v164
    %v331 = vadd.f32 %v325, %v165
    %v332 = vadd.f32 %v326, %v166
    %v333 = vmin.f32 %v327, %v330
    %v334 = vmin.f32 %v328, %v331
    %v335 = vmin.f32 %v329, %v332
    %v336 = vmin.f32 %v250, %v333
    %v337 = vmin.f32 %v251, %v334
    %v338 = vmin.f32 %v252, %v335
    %v340 = vrot.slane %v338, 7
    %v344 = vrot.slane %v336, 7
    %v345 = vrot.slane %v337, 7
    %v346 = vsel %vm123, %v344, %v345
    %v347 = vsel %vm123, %v345, %v340
    %v351 = vsel %vm123, %v340, %v344
    %v352 = vrot.slane %v336, 1
    %v353 = vrot.slane %v337, 1
    %v354 = vsel %vm135, %v352, %v353
    %v355 = vrot.slane %v338, 1
    %v356 = vsel %vm135, %v353, %v355
    %v361 = vsel %vm135, %v355, %v352
    %v362 = vmin.f32 %v351, %v354
    %v363 = vmin.f32 %v346, %v356
    %v364 = vmin.f32 %v347, %v361
    %365 = vrot.lane.b32.xlu0 %v336, 1
    %v366 = vpop.permute.xlu0 %365
    %367 = vrot.lane.b32.xlu0 %v337, 1
    %v368 = vpop.permute.xlu0 %367
    %369 = vrot.lane.b32.xlu0 %v338, 1
    %v370 = vpop.permute.xlu0 %369
    %374 = vrot.lane.b32.xlu0 %v336, 127
    %v375 = vpop.permute.xlu0 %374
    %376 = vrot.lane.b32.xlu0 %v337, 127
    %v377 = vpop.permute.xlu0 %376
    %378 = vrot.lane.b32.xlu0 %v338, 127
    %v379 = vpop.permute.xlu0 %378
    %v383 = vmin.f32 %v366, %v375
    %v384 = vmin.f32 %v368, %v377
    %v385 = vmin.f32 %v370, %v379
    %v386 = vmin.f32 %v383, %v362
    %v387 = vmin.f32 %v384, %v363
    %v388 = vmin.f32 %v385, %v364
    %392 = vrot.lane.b32.xlu0 %v362, 1
    %v393 = vpop.permute.xlu0 %392
    %394 = vrot.lane.b32.xlu0 %v363, 1
    %v395 = vpop.permute.xlu0 %394
    %396 = vrot.lane.b32.xlu0 %v364, 1
    %v397 = vpop.permute.xlu0 %396
    %401 = vrot.lane.b32.xlu0 %v362, 127
    %v402 = vpop.permute.xlu0 %401
    %403 = vrot.lane.b32.xlu0 %v363, 127
    %v404 = vpop.permute.xlu0 %403
    %405 = vrot.lane.b32.xlu0 %v364, 127
    %v406 = vpop.permute.xlu0 %405
    %v410 = vmin.f32 %v393, %v402
    %v411 = vmin.f32 %v395, %v404
    %v412 = vmin.f32 %v397, %v406
    %v413 = vadd.f32 %v386, %v158
    %v414 = vadd.f32 %v387, %v159
    %v415 = vadd.f32 %v388, %v160
    %v416 = vadd.f32 %v410, %v164
    %v417 = vadd.f32 %v411, %v165
    %v418 = vadd.f32 %v412, %v166
    %v419 = vmin.f32 %v413, %v416
    %v420 = vmin.f32 %v414, %v417
    %v421 = vmin.f32 %v415, %v418
    %v422 = vmin.f32 %v336, %v419
    %v423 = vmin.f32 %v337, %v420
    %v424 = vmin.f32 %v338, %v421
    %v426 = vrot.slane %v424, 7
    %v430 = vrot.slane %v422, 7
    %v431 = vrot.slane %v423, 7
    %v432 = vsel %vm123, %v430, %v431
    %v433 = vsel %vm123, %v431, %v426
    %v437 = vsel %vm123, %v426, %v430
    %v438 = vrot.slane %v422, 1
    %v439 = vrot.slane %v423, 1
    %v440 = vsel %vm135, %v438, %v439
    %v441 = vrot.slane %v424, 1
    %v442 = vsel %vm135, %v439, %v441
    %v447 = vsel %vm135, %v441, %v438
    %v448 = vmin.f32 %v437, %v440
    %v449 = vmin.f32 %v432, %v442
    %v450 = vmin.f32 %v433, %v447
    %451 = vrot.lane.b32.xlu0 %v422, 1
    %v452 = vpop.permute.xlu0 %451
    %453 = vrot.lane.b32.xlu0 %v423, 1
    %v454 = vpop.permute.xlu0 %453
    %455 = vrot.lane.b32.xlu0 %v424, 1
    %v456 = vpop.permute.xlu0 %455
    %460 = vrot.lane.b32.xlu0 %v422, 127
    %v461 = vpop.permute.xlu0 %460
    %462 = vrot.lane.b32.xlu0 %v423, 127
    %v463 = vpop.permute.xlu0 %462
    %464 = vrot.lane.b32.xlu0 %v424, 127
    %v465 = vpop.permute.xlu0 %464
    %v469 = vmin.f32 %v452, %v461
    %v470 = vmin.f32 %v454, %v463
    %v471 = vmin.f32 %v456, %v465
    %v472 = vmin.f32 %v469, %v448
    %v473 = vmin.f32 %v470, %v449
    %v474 = vmin.f32 %v471, %v450
    %478 = vrot.lane.b32.xlu0 %v448, 1
    %v479 = vpop.permute.xlu0 %478
    %480 = vrot.lane.b32.xlu0 %v449, 1
    %v481 = vpop.permute.xlu0 %480
    %482 = vrot.lane.b32.xlu0 %v450, 1
    %v483 = vpop.permute.xlu0 %482
    %487 = vrot.lane.b32.xlu0 %v448, 127
    %v488 = vpop.permute.xlu0 %487
    %489 = vrot.lane.b32.xlu0 %v449, 127
    %v490 = vpop.permute.xlu0 %489
    %491 = vrot.lane.b32.xlu0 %v450, 127
    %v492 = vpop.permute.xlu0 %491
    %v496 = vmin.f32 %v479, %v488
    %v497 = vmin.f32 %v481, %v490
    %v498 = vmin.f32 %v483, %v492
    %v499 = vadd.f32 %v472, %v158
    %v500 = vadd.f32 %v473, %v159
    %v501 = vadd.f32 %v474, %v160
    %v502 = vadd.f32 %v496, %v164
    %v503 = vadd.f32 %v497, %v165
    %v504 = vadd.f32 %v498, %v166
    %v505 = vmin.f32 %v499, %v502
    %v506 = vmin.f32 %v500, %v503
    %v507 = vmin.f32 %v501, %v504
    %v508 = vmin.f32 %v422, %v505
    %v509 = vmin.f32 %v423, %v506
    %v510 = vmin.f32 %v424, %v507
    %v512 = vrot.slane %v510, 7
    %v516 = vrot.slane %v508, 7
    %v517 = vrot.slane %v509, 7
    %v518 = vsel %vm123, %v516, %v517
    %v519 = vsel %vm123, %v517, %v512
    %v523 = vsel %vm123, %v512, %v516
    %v524 = vrot.slane %v508, 1
    %v525 = vrot.slane %v509, 1
    %v526 = vsel %vm135, %v524, %v525
    %v527 = vrot.slane %v510, 1
    %v528 = vsel %vm135, %v525, %v527
    %v533 = vsel %vm135, %v527, %v524
    %v534 = vmin.f32 %v523, %v526
    %v535 = vmin.f32 %v518, %v528
    %v536 = vmin.f32 %v519, %v533
    %537 = vrot.lane.b32.xlu0 %v508, 1
    %v538 = vpop.permute.xlu0 %537
    %539 = vrot.lane.b32.xlu0 %v509, 1
    %v540 = vpop.permute.xlu0 %539
    %541 = vrot.lane.b32.xlu0 %v510, 1
    %v542 = vpop.permute.xlu0 %541
    %546 = vrot.lane.b32.xlu0 %v508, 127
    %v547 = vpop.permute.xlu0 %546
    %548 = vrot.lane.b32.xlu0 %v509, 127
    %v549 = vpop.permute.xlu0 %548
    %550 = vrot.lane.b32.xlu0 %v510, 127
    %v551 = vpop.permute.xlu0 %550
    %v555 = vmin.f32 %v538, %v547
    %v556 = vmin.f32 %v540, %v549
    %v557 = vmin.f32 %v542, %v551
    %v558 = vmin.f32 %v555, %v534
    %v559 = vmin.f32 %v556, %v535
    %v560 = vmin.f32 %v557, %v536
    %564 = vrot.lane.b32.xlu0 %v534, 1
    %v565 = vpop.permute.xlu0 %564
    %566 = vrot.lane.b32.xlu0 %v535, 1
    %v567 = vpop.permute.xlu0 %566
    %568 = vrot.lane.b32.xlu0 %v536, 1
    %v569 = vpop.permute.xlu0 %568
    %573 = vrot.lane.b32.xlu0 %v534, 127
    %v574 = vpop.permute.xlu0 %573
    %575 = vrot.lane.b32.xlu0 %v535, 127
    %v576 = vpop.permute.xlu0 %575
    %577 = vrot.lane.b32.xlu0 %v536, 127
    %v578 = vpop.permute.xlu0 %577
    %v582 = vmin.f32 %v565, %v574
    %v583 = vmin.f32 %v567, %v576
    %v584 = vmin.f32 %v569, %v578
    %v585 = vadd.f32 %v558, %v158
    %v586 = vadd.f32 %v559, %v159
    %v587 = vadd.f32 %v560, %v160
    %v588 = vadd.f32 %v582, %v164
    %v589 = vadd.f32 %v583, %v165
    %v590 = vadd.f32 %v584, %v166
    %v591 = vmin.f32 %v585, %v588
    %v592 = vmin.f32 %v586, %v589
    %v593 = vmin.f32 %v587, %v590
    %v594 = vmin.f32 %v508, %v591
    %v595 = vmin.f32 %v509, %v592
    %v596 = vmin.f32 %v510, %v593
    %597 = vst [vmem:[#allocation7] sm:$0xff] %v594
    %598 = vst [vmem:[#allocation7 + $0x8] sm:$0xff] %v595
    %599 = vst [vmem:[#allocation7 + $0x10] sm:$0xff] %v596
    %v600 = vld [vmem:[%s4] sm:$0x1]
    %v601 = vld [vmem:[%s4 + $0x1] sm:$0x1]
    %v602 = vadd.f32 %v600, 1.0
    %v603 = vmul.f32 %v602, 0.5
    %v604 = vmul.f32 %v603, 15.0
    %v605 = vmax.f32 %v604, 0.0
    %v606 = vmin.f32 %v605, 15.0
    %v607 = vadd.f32 %v601, 1.0
    %v608 = vmul.f32 %v607, 0.5
    %v609 = vmul.f32 %v608, 15.0
    %v610 = vmax.f32 %v609, 0.0
    %v611 = vmin.f32 %v610, 15.0
    %v612 = vfloor.f32 %v606
    %v613 = vfloor.f32 %v611
    %v614 = vsub.f32 %v606, %v612
    %v615 = vsub.f32 1.0, %v614
    %v616 = vsub.f32 %v611, %v613
    %v617 = vsub.f32 1.0, %v616
    %v618 = vcvt.f32.s32.to.zero.pseudo %v612
    %v619 = vcvt.f32.s32.to.zero.pseudo %v613
    %v620 = vadd.s32 %v618, 1
    %vm621 = vcmp.lt.s32.totalorder %v620, 15
    %v622 = vsel %vm621, %v620, 15
    %v623 = vadd.s32 %v619, 1
    %vm624 = vcmp.lt.s32.totalorder %v623, 15
    %v625 = vsel %vm624, %v623, 15
    %v626 = vmax.f32 %v594, -1e+30
    %v627 = vmax.f32 %v595, -1e+30
    %v628 = vmax.f32 %v596, -1e+30
    %v629 = vmin.f32 %v626, 1e+30
    %v630 = vmin.f32 %v627, 1e+30
    %v631 = vmin.f32 %v628, 1e+30
    %v632 = vlaneseq
    %v633 = vshrl.u32 %v632, 7
    %v634 = vadd.s32 %v633, 8
    %v635 = vadd.s32 %v633, 16
    %v636 = vadd.s32 %v633, 24
    %v637 = vadd.s32 %v633, 32
    %v638 = vadd.s32 %v633, 40
    %v639 = vadd.s32 %v633, 48
    %v640 = vadd.s32 %v633, 56
    %v641 = vadd.s32 %v633, 64
    %v642 = vadd.s32 %v633, 72
    %v643 = vadd.s32 %v633, 80
    %v644 = vadd.s32 %v633, 88
    %v645 = vadd.s32 %v633, 96
    %v646 = vadd.s32 %v633, 104
    %v647 = vadd.s32 %v633, 112
    %v648 = vadd.s32 %v633, 120
    %v649 = vlaneseq
    %v650 = vshrl.u32 %v649, 7
    %v651 = vsub.s32 0, %v650
    %v652 = vrot.slane %v618, %v651
    %vm653 = vcmp.eq.s32.totalorder %v633, %v652
    %vm654 = vcmp.eq.s32.totalorder %v634, %v652
    %vm655 = vcmp.eq.s32.totalorder %v635, %v652
    %vm656 = vcmp.eq.s32.totalorder %v636, %v652
    %vm657 = vcmp.eq.s32.totalorder %v637, %v652
    %vm658 = vcmp.eq.s32.totalorder %v638, %v652
    %vm659 = vcmp.eq.s32.totalorder %v639, %v652
    %vm660 = vcmp.eq.s32.totalorder %v640, %v652
    %vm661 = vcmp.eq.s32.totalorder %v641, %v652
    %vm662 = vcmp.eq.s32.totalorder %v642, %v652
    %vm663 = vcmp.eq.s32.totalorder %v643, %v652
    %vm664 = vcmp.eq.s32.totalorder %v644, %v652
    %vm665 = vcmp.eq.s32.totalorder %v645, %v652
    %vm666 = vcmp.eq.s32.totalorder %v646, %v652
    %vm667 = vcmp.eq.s32.totalorder %v647, %v652
    %vm668 = vcmp.eq.s32.totalorder %v648, %v652
    %v669 = vlaneseq
    %v670 = vshrl.u32 %v669, 7
    %v671 = vsub.s32 0, %v670
    %v672 = vrot.slane %v615, %v671
    %v673 = vsel %vm653, %v672, 0.0
    %v674 = vsel %vm654, %v672, 0.0
    %v675 = vsel %vm655, %v672, 0.0
    %v676 = vsel %vm656, %v672, 0.0
    %v677 = vsel %vm657, %v672, 0.0
    %v678 = vsel %vm658, %v672, 0.0
    %v679 = vsel %vm659, %v672, 0.0
    %v680 = vsel %vm660, %v672, 0.0
    %v681 = vsel %vm661, %v672, 0.0
    %v682 = vsel %vm662, %v672, 0.0
    %v683 = vsel %vm663, %v672, 0.0
    %v684 = vsel %vm664, %v672, 0.0
    %v685 = vsel %vm665, %v672, 0.0
    %v686 = vsel %vm666, %v672, 0.0
    %v687 = vsel %vm667, %v672, 0.0
    %v688 = vsel %vm668, %v672, 0.0
    %v689 = vlaneseq
    %v690 = vshrl.u32 %v689, 7
    %v691 = vsub.s32 0, %v690
    %v692 = vrot.slane %v622, %v691
    %vm693 = vcmp.eq.s32.totalorder %v633, %v692
    %vm694 = vcmp.eq.s32.totalorder %v634, %v692
    %vm695 = vcmp.eq.s32.totalorder %v635, %v692
    %vm696 = vcmp.eq.s32.totalorder %v636, %v692
    %vm697 = vcmp.eq.s32.totalorder %v637, %v692
    %vm698 = vcmp.eq.s32.totalorder %v638, %v692
    %vm699 = vcmp.eq.s32.totalorder %v639, %v692
    %vm700 = vcmp.eq.s32.totalorder %v640, %v692
    %vm701 = vcmp.eq.s32.totalorder %v641, %v692
    %vm702 = vcmp.eq.s32.totalorder %v642, %v692
    %vm703 = vcmp.eq.s32.totalorder %v643, %v692
    %vm704 = vcmp.eq.s32.totalorder %v644, %v692
    %vm705 = vcmp.eq.s32.totalorder %v645, %v692
    %vm706 = vcmp.eq.s32.totalorder %v646, %v692
    %vm707 = vcmp.eq.s32.totalorder %v647, %v692
    %vm708 = vcmp.eq.s32.totalorder %v648, %v692
    %v709 = vlaneseq
    %v710 = vshrl.u32 %v709, 7
    %v711 = vsub.s32 0, %v710
    %v712 = vrot.slane %v614, %v711
    %v713 = vsel %vm693, %v712, 0.0
    %v714 = vsel %vm694, %v712, 0.0
    %v715 = vsel %vm695, %v712, 0.0
    %v716 = vsel %vm696, %v712, 0.0
    %v717 = vsel %vm697, %v712, 0.0
    %v718 = vsel %vm698, %v712, 0.0
    %v719 = vsel %vm699, %v712, 0.0
    %v720 = vsel %vm700, %v712, 0.0
    %v721 = vsel %vm701, %v712, 0.0
    %v722 = vsel %vm702, %v712, 0.0
    %v723 = vsel %vm703, %v712, 0.0
    %v724 = vsel %vm704, %v712, 0.0
    %v725 = vsel %vm705, %v712, 0.0
    %v726 = vsel %vm706, %v712, 0.0
    %v727 = vsel %vm707, %v712, 0.0
    %v728 = vsel %vm708, %v712, 0.0
    %v729 = vadd.f32 %v673, %v713
    %v730 = vadd.f32 %v674, %v714
    %v731 = vadd.f32 %v675, %v715
    %v732 = vadd.f32 %v676, %v716
    %v733 = vadd.f32 %v677, %v717
    %v734 = vadd.f32 %v678, %v718
    %v735 = vadd.f32 %v679, %v719
    %v736 = vadd.f32 %v680, %v720
    %v737 = vadd.f32 %v681, %v721
    %v738 = vadd.f32 %v682, %v722
    %v739 = vadd.f32 %v683, %v723
    %v740 = vadd.f32 %v684, %v724
    %v741 = vadd.f32 %v685, %v725
    %v742 = vadd.f32 %v686, %v726
    %v743 = vadd.f32 %v687, %v727
    %v744 = vadd.f32 %v688, %v728
    %745 = vmatprep.subr.mxu0 0.0
    %746 = vmatpush1.msra.mxu0 %v729
    %747 = vmatprep.subr.mxu0 0.0
    %748 = vmatpush1.msra.mxu0 %v730
    %749 = vmatprep.subr.mxu0 0.0
    %750 = vmatpush1.msra.mxu0 %v731
    %751 = vmatprep.subr.mxu0 0.0
    %752 = vmatpush1.msra.mxu0 %v732
    %753 = vmatprep.subr.mxu0 0.0
    %754 = vmatpush1.msra.mxu0 %v733
    %755 = vmatprep.subr.mxu0 0.0
    %756 = vmatpush1.msra.mxu0 %v734
    %757 = vmatprep.subr.mxu0 0.0
    %758 = vmatpush1.msra.mxu0 %v735
    %759 = vmatprep.subr.mxu0 0.0
    %760 = vmatpush1.msra.mxu0 %v736
    %761 = vmatprep.subr.mxu0 0.0
    %762 = vmatpush1.msra.mxu0 %v737
    %763 = vmatprep.subr.mxu0 0.0
    %764 = vmatpush1.msra.mxu0 %v738
    %765 = vmatprep.subr.mxu0 0.0
    %766 = vmatpush1.msra.mxu0 %v739
    %767 = vmatprep.subr.mxu0 0.0
    %768 = vmatpush1.msra.mxu0 %v740
    %769 = vmatprep.subr.mxu0 0.0
    %770 = vmatpush1.msra.mxu0 %v741
    %771 = vmatprep.subr.mxu0 0.0
    %772 = vmatpush1.msra.mxu0 %v742
    %773 = vmatprep.subr.mxu0 0.0
    %774 = vmatpush1.msra.mxu0 %v743
    %775 = vmatprep.subr.mxu0 0.0
    %776 = vmatpush1.msra.mxu0 %v744
    %777 = vmatprep.subr.mxu0 0.0
    %778 = vmatpush1.msra.mxu0 0.0
    %779 = vmatprep.subr.mxu0 0.0
    %780 = vmatpush1.msra.mxu0 0.0
    %781 = vmatprep.subr.mxu0 0.0
    %782 = vmatpush1.msra.mxu0 0.0
    %783 = vmatprep.subr.mxu0 0.0
    %784 = vmatpush1.msra.mxu0 0.0
    %785 = vmatprep.subr.mxu0 0.0
    %786 = vmatpush1.msra.mxu0 0.0
    %787 = vmatprep.subr.mxu0 0.0
    %788 = vmatpush1.msra.mxu0 0.0
    %789 = vmatprep.subr.mxu0 0.0
    %790 = vmatpush1.msra.mxu0 0.0
    %791 = vmatprep.subr.mxu0 0.0
    %792 = vmatpush1.msra.mxu0 0.0
    %793 = vmatprep.subr.mxu0 0.0
    %794 = vmatpush1.msra.mxu0 0.0
    %795 = vmatprep.subr.mxu0 0.0
    %796 = vmatpush1.msra.mxu0 0.0
    %797 = vmatprep.subr.mxu0 0.0
    %798 = vmatpush1.msra.mxu0 0.0
    %799 = vmatprep.subr.mxu0 0.0
    %800 = vmatpush1.msra.mxu0 0.0
    %801 = vmatprep.subr.mxu0 0.0
    %802 = vmatpush1.msra.mxu0 0.0
    %803 = vmatprep.subr.mxu0 0.0
    %804 = vmatpush1.msra.mxu0 0.0
    %805 = vmatprep.subr.mxu0 0.0
    %806 = vmatpush1.msra.mxu0 0.0
    %807 = vmatprep.subr.mxu0 0.0
    %808 = vmatpush1.msra.mxu0 0.0
    %809 = vmatprep.mubr.f32.mxu0 0.0
    %810 = vmatmul.mubr.f32.gmra.mrb[0].mxu0 %v629
    %v811 = vpop.f32.mrb[0].mxu0
    %v812 = vadd.f32 0.0, %v811
    %v813 = vpop.f32.mrb[0].mxu0
    %814 = vmatprep.mubr.f32.mxu0 0.0
    %815 = vmatmul.mubr.f32.gmra.mrb[0].mxu0 %v630
    %v816 = vpop.f32.mrb[0].mxu0
    %v817 = vadd.f32 0.0, %v816
    %v818 = vpop.f32.mrb[0].mxu0
    %819 = vmatprep.mubr.f32.mxu0 0.0
    %820 = vmatmul.mubr.f32.gmra.mrb[0].mxu0 %v631
    %v821 = vpop.f32.mrb[0].mxu0
    %v822 = vadd.f32 0.0, %v821
    %v823 = vpop.f32.mrb[0].mxu0
    %824 = vdwg.mxu0
    %v825 = vlaneseq
    %v826 = vshrl.u32 %v825, 7
    %v827 = vsub.s32 0, %v826
    %v828 = vrot.slane %v619, %v827
    %vm829 = vcmp.eq.s32.totalorder %v633, %v828
    %vm830 = vcmp.eq.s32.totalorder %v634, %v828
    %vm831 = vcmp.eq.s32.totalorder %v635, %v828
    %v832 = vlaneseq
    %v833 = vshrl.u32 %v832, 7
    %v834 = vsub.s32 0, %v833
    %v835 = vrot.slane %v617, %v834
    %v836 = vsel %vm829, %v835, 0.0
    %v837 = vsel %vm830, %v835, 0.0
    %v838 = vsel %vm831, %v835, 0.0
    %v839 = vlaneseq
    %v840 = vshrl.u32 %v839, 7
    %v841 = vsub.s32 0, %v840
    %v842 = vrot.slane %v625, %v841
    %vm843 = vcmp.eq.s32.totalorder %v633, %v842
    %vm844 = vcmp.eq.s32.totalorder %v634, %v842
    %vm845 = vcmp.eq.s32.totalorder %v635, %v842
    %v846 = vlaneseq
    %v847 = vshrl.u32 %v846, 7
    %v848 = vsub.s32 0, %v847
    %v849 = vrot.slane %v616, %v848
    %v850 = vsel %vm843, %v849, 0.0
    %v851 = vsel %vm844, %v849, 0.0
    %v852 = vsel %vm845, %v849, 0.0
    %v853 = vadd.f32 %v836, %v850
    %v854 = vadd.f32 %v837, %v851
    %v855 = vadd.f32 %v838, %v852
    %v856 = vmul.f32 %v853, %v812
    %v857 = vmul.f32 %v854, %v817
    %v858 = vmul.f32 %v855, %v822
    %v859 = vadd.f32 %v856, %v857
    %v860 = vadd.f32 %v859, %v858
    %v861 = vrot.slane %v860, 4
    %v862 = vadd.f32 %v860, %v861
    %v863 = vrot.slane %v862, 2
    %v864 = vadd.f32 %v862, %v863
    %v865 = vrot.slane %v864, 1
    %v866 = vadd.f32 %v864, %v865
    %867 = vst [vmem:[#allocation8] sm:$0x1] %v866
    // Predicated region
    $region30: #{tpu_custom_call.1} parent=1 // pred_check
      _
    $region31: #{tpu_custom_call.1} parent=1 // pred_check_branch
      %869 = sbr.rel (0) target = $region33
    $region32: #{tpu_custom_call.1} parent=1 // pred_region
      %s871 = ssub.s32 384, 384
      %872 = vsyncadd [#allocation4], %s871
      %s873 = sshll.u32 [#allocation7], 4
      %s874 = int_to_ptr.vmem [resolvable:$true] %s873
      %879 = dma.vmem_to_hbm [thread:$0]  %s874, 384, %s5, [#allocation4], 128, 128, 8
    $region33: #{tpu_custom_call.1} parent=1 // pred_fallthru
      _
    // Predicated region
    $region34: #{tpu_custom_call.1} parent=1 // pred_check
      _
    $region35: #{tpu_custom_call.1} parent=1 // pred_check_branch
      %881 = sbr.rel (0) target = $region37
    $region36: #{tpu_custom_call.1} parent=1 // pred_region
      %s883 = ssub.s32 16, 16
      %884 = vsyncadd [#allocation9], %s883
      %s886 = sshll.u32 [#allocation8], 4
      %s887 = int_to_ptr.vmem [resolvable:$true] %s886
      %889 = dma.vmem_to_hbm [thread:$0]  %s887, 16, %s6, [#allocation9]
    $region37: #{tpu_custom_call.1} parent=1 // pred_fallthru
      _
    // Predicated region
    $region38: #{tpu_custom_call.1} parent=1 // pred_check
      _
    $region39: #{tpu_custom_call.1} parent=1 // pred_check_branch
      %891 = sbr.rel (0) target = $region41
    $region40: #{tpu_custom_call.1} parent=1 // pred_region
      %892 = dma.done [#allocation4], 384
    $region41: #{tpu_custom_call.1} parent=1 // pred_fallthru
      _
    // Predicated region
    $region42: #{tpu_custom_call.1} parent=1 // pred_check
      _
    $region43: #{tpu_custom_call.1} parent=1 // pred_check_branch
      %894 = sbr.rel (0) target = $region45
    $region44: #{tpu_custom_call.1} parent=1 // pred_region
      %895 = dma.done [#allocation9], 16
    $region45: #{tpu_custom_call.1} parent=1 // pred_fallthru
      _
    %896 = vsyncpa [#allocation3], 1
    %897 = vsyncpa [#allocation6], 1
    %898 = vsyncpa [#allocation4], 1
    %899 = vsyncpa [#allocation9], 1

</llo_original>
